<compile_context>
chip_gen: v7x
topology: tpu7x:2x2x1
jax: 0.10.0
libtpu: 0.0.40
codegen_flags: <defaults>
</compile_context>

<pallas_src>
import functools

import jax
import jax.numpy as jnp
from jax import lax
from jax.experimental import pallas as pl
from jax.experimental.pallas import tpu as pltpu


def _round_up(x, m):
    return ((x + m - 1) // m) * m


def memnn_kernel(context_ref, topic_ref, topic_t_ref, out_ref, dist_ref,
                 acc_ref, *, hops, topic_num):
    """Grid = (batch_tiles [parallel], seq_tiles [arbitrary/reduction]).

    context_ref : (ts, tb, rnn_p)   seq tile of the (padded) context
    topic_ref   : (rnn_p, topic_p)  padded topic matrix
    topic_t_ref : (topic_p, rnn_p)  its transpose (pre-transposed in wrapper)
    out_ref     : (tb, rnn_p)       topic-aware vector (padded, lane-dense)
    dist_ref    : (tb, topic_p)     last-hop topic distribution (padded)
    acc_ref     : (tb, rnn_p) f32   running seq-sum accumulator (scratch)
    """
    si = pl.program_id(1)
    n_seq = pl.num_programs(1)

    @pl.when(si == 0)
    def _init():
        acc_ref[...] = jnp.zeros_like(acc_ref)

    # Partial sum over this seq tile (padding rows are zero, so they are inert).
    acc_ref[...] += jnp.sum(context_ref[...].astype(jnp.float32), axis=0)

    @pl.when(si == n_seq - 1)
    def _finalize():
        out = acc_ref[...]                       # (tb, rnn_p), f32
        topic = topic_ref[...]                   # (rnn_p, topic_p)
        topic_t = topic_t_ref[...]               # (topic_p, rnn_p)

        tb = out.shape[0]
        topic_p = topic.shape[1]
        needs_mask = topic_p > topic_num
        if needs_mask:
            col = lax.broadcasted_iota(jnp.int32, (tb, topic_p), 1)
            pad_mask = col < topic_num

        dist = jnp.zeros((tb, topic_p), jnp.float32)
        # hops is a small static constant -> unrolled Python loop.
        for _ in range(hops):
            # simi = out @ topic  -> (tb, topic_p)   (MXU)
            simi = jnp.dot(out, topic, preferred_element_type=jnp.float32)
            if needs_mask:
                # Padded topic columns must not contribute to the softmax.
                simi = jnp.where(pad_mask, simi, jnp.float32(-1e30))
            # Softmax over topic axis (nn.Softmax() on 2D -> dim=1).
            m = jnp.max(simi, axis=-1, keepdims=True)
            e = jnp.exp(simi - m)
            denom = jnp.sum(e, axis=-1, keepdims=True)
            # EUP reciprocal instead of a VALU divide.
            dist = e * pl.reciprocal(denom, approx=True)
            # out = out + dist @ topic^T   (topic^T pre-computed, no per-hop XLU)
            out = out + jnp.dot(dist, topic_t, preferred_element_type=jnp.float32)

        out_ref[...] = out.astype(out_ref.dtype)
        dist_ref[...] = dist.astype(dist_ref.dtype)


def memnn_forward(context, topic_matrix, hops, *, seq_tile=None, batch_tile=None):
    """context: (seq, batch, rnn); topic_matrix: (rnn, topic_num)."""
    assert hops >= 1, "topic_dist is undefined for hops < 1 (matches PyTorch)"
    seq_len, batch, rnn = context.shape
    rnn2, topic_num = topic_matrix.shape
    assert rnn == rnn2

    # Lane-dense padded sizes: last dims -> x128, sublane (batch) -> x8.
    rnn_p = _round_up(rnn, 128)
    topic_p = _round_up(topic_num, 128)

    tb = batch_tile if batch_tile is not None else min(_round_up(batch, 8), 128)
    tb = _round_up(tb, 8)
    batch_p = _round_up(_round_up(batch, 8), tb)

    # Pick the largest seq tile whose double-buffered context footprint stays
    # under ~8 MiB (mem-bound reduction -> big tiles amortize per-step overhead,
    # but must leave VMEM headroom for topic buffers / outputs / scratch).
    if seq_tile is not None:
        ts = seq_tile
    else:
        itemsize = jnp.dtype(context.dtype).itemsize
        ctx_budget = 8 * 1024 * 1024
        ts = max(1, ctx_budget // (2 * tb * rnn_p * itemsize))
        ts = min(ts, seq_len, 512)
    seq_p = _round_up(seq_len, ts)

    # Zero padding: inert for the seq-sum, for padded rnn columns, and (with the
    # in-kernel -1e30 logit mask) for padded topic columns.
    ctx_p = jnp.pad(context, ((0, seq_p - seq_len),
                              (0, batch_p - batch),
                              (0, rnn_p - rnn)))
    topic_pad = jnp.pad(topic_matrix, ((0, rnn_p - rnn), (0, topic_p - topic_num)))
    topic_t_pad = topic_pad.T  # transpose hoisted out of the hop loop (XLA, once)

    grid = (batch_p // tb, seq_p // ts)

    out_p, dist_p = pl.pallas_call(
        functools.partial(memnn_kernel, hops=hops, topic_num=topic_num),
        grid=grid,
        in_specs=[
            pl.BlockSpec((ts, tb, rnn_p), lambda bi, si: (si, bi, 0)),
            pl.BlockSpec((rnn_p, topic_p), lambda bi, si: (0, 0)),
            pl.BlockSpec((topic_p, rnn_p), lambda bi, si: (0, 0)),
        ],
        out_specs=(
            pl.BlockSpec((tb, rnn_p), lambda bi, si: (bi, 0)),
            pl.BlockSpec((tb, topic_p), lambda bi, si: (bi, 0)),
        ),
        out_shape=(
            jax.ShapeDtypeStruct((batch_p, rnn_p), context.dtype),
            jax.ShapeDtypeStruct((batch_p, topic_p), context.dtype),
        ),
        scratch_shapes=[pltpu.VMEM((tb, rnn_p), jnp.float32)],
        compiler_params=pltpu.CompilerParams(
            dimension_semantics=("parallel", "arbitrary"),
            vmem_limit_bytes=32 * 1024 * 1024),
    )(ctx_p, topic_pad, topic_t_pad)

    out2d = out_p[:batch, :rnn]
    dist = dist_p[:batch, :topic_num]
    # topic_aware_vec: (batch, rnn_size, 1); topic_dist: (batch, topic_num)
    return out2d[:, :, None], dist


def memnn_reference(context, topic_matrix, hops):
    out = jnp.sum(context.astype(jnp.float32), axis=0)           # (batch, rnn)
    topic = topic_matrix.astype(jnp.float32)
    dist = None
    for _ in range(hops):
        simi = out @ topic                                        # (batch, topic)
        dist = jax.nn.softmax(simi, axis=-1)
        out = out + dist @ topic.T
    return out[:, :, None], dist


if __name__ == "__main__":
    # Small shapes consistent with the module's forward.
    seq_len, batch, rnn_size, topic_num, hops = 8, 2, 32, 8, 2

    key = jax.random.PRNGKey(0)
    k_ctx, k_topic = jax.random.split(key)
    context = jax.random.normal(k_ctx, (seq_len, batch, rnn_size), jnp.float32)
    # Deterministic "parameter" init for the topic memory matrix.
    topic_matrix = jax.random.normal(k_topic, (rnn_size, topic_num), jnp.float32) * 0.1

    out_vec, topic_dist = memnn_forward(context, topic_matrix, hops)
    jax.block_until_ready((out_vec, topic_dist))

    ref_vec, ref_dist = memnn_reference(context, topic_matrix, hops)
    assert out_vec.shape == (batch, rnn_size, 1)
    assert topic_dist.shape == (batch, topic_num)
    # Tolerances account for the EUP approximate reciprocal in the softmax.
    assert jnp.allclose(out_vec, ref_vec, atol=2e-3, rtol=2e-3)
    assert jnp.allclose(topic_dist, ref_dist, atol=2e-3, rtol=2e-3)

    print("KERNEL_OK")
</pallas_src>

<mosaic_0001>
module attributes {stable_mosaic.version = 11 : i64} {
  func.func @memnn_kernel(%arg0: i32, %arg1: i32, %arg2: memref<8x8x128xf32, #tpu.memory_space<vmem>>, %arg3: memref<128x128xf32, #tpu.memory_space<vmem>>, %arg4: memref<128x128xf32, #tpu.memory_space<vmem>>, %arg5: memref<8x128xf32, #tpu.memory_space<vmem>>, %arg6: memref<8x128xf32, #tpu.memory_space<vmem>>, %arg7: memref<8x128xf32, #tpu.memory_space<vmem>>) attributes {dimension_semantics = [#tpu.dimension_semantics<parallel>, #tpu.dimension_semantics<arbitrary>], iteration_bounds = array<i64: 1, 1>, scalar_prefetch = 0 : i64, scratch_operands = 1 : i64, tpu.core_type = #tpu.core_type<tc>, window_params = [{transform_indices = @transform_0, window_bounds = array<i64: 8, 8, 128>}, {pipeline_mode = #tpu.pipeline_mode<synchronous>, transform_indices = @transform_1, window_bounds = array<i64: 128, 128>}, {pipeline_mode = #tpu.pipeline_mode<synchronous>, transform_indices = @transform_2, window_bounds = array<i64: 128, 128>}, {transform_indices = @transform_3, window_bounds = array<i64: 8, 128>}, {transform_indices = @transform_4, window_bounds = array<i64: 8, 128>}]} {
    %c0_i32 = arith.constant 0 : i32
    %0 = arith.cmpi eq, %arg1, %c0_i32 : i32
    %1 = arith.extui %0 : i1 to i32
    %c0_i32_0 = arith.constant 0 : i32
    %2 = arith.cmpi ne, %1, %c0_i32_0 : i32
    scf.if %2 {
      %cst_9 = arith.constant 0.000000e+00 : f32
      %11 = vector.broadcast %cst_9 : f32 to vector<8x128xf32>
      %c0_10 = arith.constant 0 : index
      %c0_11 = arith.constant 0 : index
      %12 = vector.load %arg7[%c0_10, %c0_11] : memref<8x128xf32, #tpu.memory_space<vmem>>, vector<8x128xf32>
      tpu.vector_store %arg7[%c0_10, %c0_11], %11 {strides = array<i32>} : memref<8x128xf32, #tpu.memory_space<vmem>>, vector<8x128xf32>,
    } else {
    }
    %c0 = arith.constant 0 : index
    %c0_1 = arith.constant 0 : index
    %3 = vector.load %arg7[%c0, %c0_1] : memref<8x128xf32, #tpu.memory_space<vmem>>, vector<8x128xf32>
    %c0_2 = arith.constant 0 : index
    %c0_3 = arith.constant 0 : index
    %c0_4 = arith.constant 0 : index
    %4 = vector.load %arg2[%c0_2, %c0_3, %c0_4] : memref<8x8x128xf32, #tpu.memory_space<vmem>>, vector<8x8x128xf32>
    %cst = arith.constant dense<0.000000e+00> : vector<8x128xf32>
    %5 = vector.multi_reduction <add>, %4, %cst [0] : vector<8x8x128xf32> to vector<8x128xf32>
    %6 = arith.addf %3, %5 : vector<8x128xf32>
    %c0_5 = arith.constant 0 : index
    %c0_6 = arith.constant 0 : index
    %7 = vector.load %arg7[%c0_5, %c0_6] : memref<8x128xf32, #tpu.memory_space<vmem>>, vector<8x128xf32>
    tpu.vector_store %arg7[%c0_5, %c0_6], %6 {strides = array<i32>} : memref<8x128xf32, #tpu.memory_space<vmem>>, vector<8x128xf32>,
    %c0_i32_7 = arith.constant 0 : i32
    %8 = arith.cmpi eq, %arg1, %c0_i32_7 : i32
    %9 = arith.extui %8 : i1 to i32
    %c0_i32_8 = arith.constant 0 : i32
    %10 = arith.cmpi ne, %9, %c0_i32_8 : i32
    scf.if %10 {
      %c0_9 = arith.constant 0 : index
      %c0_10 = arith.constant 0 : index
      %11 = vector.load %arg7[%c0_9, %c0_10] : memref<8x128xf32, #tpu.memory_space<vmem>>, vector<8x128xf32>
      %c0_11 = arith.constant 0 : index
      %c0_12 = arith.constant 0 : index
      %12 = vector.load %arg3[%c0_11, %c0_12] : memref<128x128xf32, #tpu.memory_space<vmem>>, vector<128x128xf32>
      %c0_13 = arith.constant 0 : index
      %c0_14 = arith.constant 0 : index
      %13 = vector.load %arg4[%c0_13, %c0_14] : memref<128x128xf32, #tpu.memory_space<vmem>>, vector<128x128xf32>
      %14 = tpu.iota {dimensions = array<i32: 1>} : vector<8x128xi32>
      %c8_i32 = arith.constant 8 : i32
      %15 = vector.broadcast %c8_i32 : i32 to vector<8x128xi32>
      %16 = arith.cmpi slt, %14, %15 : vector<8x128xi32>
      %cst_15 = arith.constant dense<0.000000e+00> : vector<8x128xf32>
      %17 = tpu.matmul %11, %12, %cst_15 {dimension_numbers = #tpu.dot_dimension_numbers<[1], [0], [0], [1], [0, 0, 1, 1], [], []>} : vector<8x128xf32>, vector<128x128xf32>, vector<8x128xf32> -> vector<8x128xf32>
      %cst_16 = arith.constant -1.000000e+30 : f32
      %18 = vector.broadcast %cst_16 : f32 to vector<8x128xf32>
      %19 = arith.select %16, %17, %18 : vector<8x128xi1>, vector<8x128xf32>
      %cst_17 = arith.constant dense<0xFF800000> : vector<8xf32>
      %20 = vector.multi_reduction <maximumf>, %19, %cst_17 [1] : vector<8x128xf32> to vector<8xf32>
      %21 = vector.shape_cast %20 : vector<8xf32> to vector<8x1xf32>
      %22 = vector.broadcast %21 : vector<8x1xf32> to vector<8x128xf32>
      %23 = arith.subf %19, %22 : vector<8x128xf32>
      %24 = math.exp %23 : vector<8x128xf32>
      %cst_18 = arith.constant dense<0.000000e+00> : vector<8xf32>
      %25 = vector.multi_reduction <add>, %24, %cst_18 [1] : vector<8x128xf32> to vector<8xf32>
      %26 = vector.shape_cast %25 : vector<8xf32> to vector<8x1xf32>
      %27 = tpu.reciprocal %26 {approx = true} : vector<8x1xf32> -> vector<8x1xf32>
      %28 = vector.broadcast %27 : vector<8x1xf32> to vector<8x128xf32>
      %29 = arith.mulf %24, %28 : vector<8x128xf32>
      %cst_19 = arith.constant dense<0.000000e+00> : vector<8x128xf32>
      %30 = tpu.matmul %29, %13, %cst_19 {dimension_numbers = #tpu.dot_dimension_numbers<[1], [0], [0], [1], [0, 0, 1, 1], [], []>} : vector<8x128xf32>, vector<128x128xf32>, vector<8x128xf32> -> vector<8x128xf32>
      %31 = arith.addf %11, %30 : vector<8x128xf32>
      %cst_20 = arith.constant dense<0.000000e+00> : vector<8x128xf32>
      %32 = tpu.matmul %31, %12, %cst_20 {dimension_numbers = #tpu.dot_dimension_numbers<[1], [0], [0], [1], [0, 0, 1, 1], [], []>} : vector<8x128xf32>, vector<128x128xf32>, vector<8x128xf32> -> vector<8x128xf32>
      %cst_21 = arith.constant -1.000000e+30 : f32
      %33 = vector.broadcast %cst_21 : f32 to vector<8x128xf32>
      %34 = arith.select %16, %32, %33 : vector<8x128xi1>, vector<8x128xf32>
      %cst_22 = arith.constant dense<0xFF800000> : vector<8xf32>
      %35 = vector.multi_reduction <maximumf>, %34, %cst_22 [1] : vector<8x128xf32> to vector<8xf32>
      %36 = vector.shape_cast %35 : vector<8xf32> to vector<8x1xf32>
      %37 = vector.broadcast %36 : vector<8x1xf32> to vector<8x128xf32>
      %38 = arith.subf %34, %37 : vector<8x128xf32>
      %39 = math.exp %38 : vector<8x128xf32>
      %cst_23 = arith.constant dense<0.000000e+00> : vector<8xf32>
      %40 = vector.multi_reduction <add>, %39, %cst_23 [1] : vector<8x128xf32> to vector<8xf32>
      %41 = vector.shape_cast %40 : vector<8xf32> to vector<8x1xf32>
      %42 = tpu.reciprocal %41 {approx = true} : vector<8x1xf32> -> vector<8x1xf32>
      %43 = vector.broadcast %42 : vector<8x1xf32> to vector<8x128xf32>
      %44 = arith.mulf %39, %43 : vector<8x128xf32>
      %cst_24 = arith.constant dense<0.000000e+00> : vector<8x128xf32>
      %45 = tpu.matmul %44, %13, %cst_24 {dimension_numbers = #tpu.dot_dimension_numbers<[1], [0], [0], [1], [0, 0, 1, 1], [], []>} : vector<8x128xf32>, vector<128x128xf32>, vector<8x128xf32> -> vector<8x128xf32>
      %46 = arith.addf %31, %45 : vector<8x128xf32>
      %c0_25 = arith.constant 0 : index
      %c0_26 = arith.constant 0 : index
      %47 = vector.load %arg5[%c0_25, %c0_26] : memref<8x128xf32, #tpu.memory_space<vmem>>, vector<8x128xf32>
      tpu.vector_store %arg5[%c0_25, %c0_26], %46 {strides = array<i32>} : memref<8x128xf32, #tpu.memory_space<vmem>>, vector<8x128xf32>,
      %c0_27 = arith.constant 0 : index
      %c0_28 = arith.constant 0 : index
      %48 = vector.load %arg6[%c0_27, %c0_28] : memref<8x128xf32, #tpu.memory_space<vmem>>, vector<8x128xf32>
      tpu.vector_store %arg6[%c0_27, %c0_28], %44 {strides = array<i32>} : memref<8x128xf32, #tpu.memory_space<vmem>>, vector<8x128xf32>,
    } else {
    }
    return
  }
  func.func @transform_0(%arg0: i32, %arg1: i32) -> (i32, i32, i32) {
    %c0_i32 = arith.constant 0 : i32
    %c0_i32_0 = arith.constant 0 : i32
    return %arg1, %arg0, %c0_i32 : i32, i32, i32
  }
  func.func @transform_1(%arg0: i32, %arg1: i32) -> (i32, i32) {
    %c0_i32 = arith.constant 0 : i32
    %c0_i32_0 = arith.constant 0 : i32
    %c0_i32_1 = arith.constant 0 : i32
    return %c0_i32, %c0_i32_0 : i32, i32
  }
  func.func @transform_2(%arg0: i32, %arg1: i32) -> (i32, i32) {
    %c0_i32 = arith.constant 0 : i32
    %c0_i32_0 = arith.constant 0 : i32
    %c0_i32_1 = arith.constant 0 : i32
    return %c0_i32, %c0_i32_0 : i32, i32
  }
  func.func @transform_3(%arg0: i32, %arg1: i32) -> (i32, i32) {
    %c0_i32 = arith.constant 0 : i32
    %c0_i32_0 = arith.constant 0 : i32
    return %arg0, %c0_i32 : i32, i32
  }
  func.func @transform_4(%arg0: i32, %arg1: i32) -> (i32, i32) {
    %c0_i32 = arith.constant 0 : i32
    %c0_i32_0 = arith.constant 0 : i32
    return %arg0, %c0_i32 : i32, i32
  }
}

</mosaic_0001>

<llo_original>
// kernel: tpu_custom_call.1
$region0: #{tpu_custom_call.1}
  #allocation0 [shape = 'u32[]', space=smem, size = 0x4, offset = 0x4, fixed_abs, tag = 'smem constant byte address 0x4 - core index']
  #allocation1 [shape = 'u32[144,128]{1,0:T(1,128)}', space=vmem, size = 0x12000, scoped, tag = 'internal scratch']
  #allocation2 [shape = 'f32[8,128]{1,0:T(8,128)}', space=vmem, size = 0x1000, scoped, tag = 'scratch operand']
  %s0 = inlined_call_operand.hbm [shape: f32[8,8,128], index: 0, kind: input, shape index: {}]
  %s1 = inlined_call_operand.hbm [shape: f32[128,128], index: 1, kind: input, shape index: {}]
  %s2 = inlined_call_operand.hbm [shape: f32[128,128], index: 2, kind: input, shape index: {}]
  %s3 = inlined_call_operand.hbm [shape: f32[8,128], index: 3, kind: output, shape index: {0}]
  %s4 = inlined_call_operand.hbm [shape: f32[8,128], index: 4, kind: output, shape index: {1}]
  %5 = xla_tuple %s3, %s4
  %s6 = sld [smem:[#allocation0]]
  $region50: #{tpu_custom_call.1} parent=0
    _
  %s8 = ssub.s32 1, %s6
  %s9 = scalar_select 0, %s8, %s6
  $region1: #{tpu_custom_call.1} parent=0
    #allocation3 [shape = 'u8[32768]{0}', space=vmem, size = 0x8000, scoped, tag = 'input window, operand 0, single buffered']
    #allocation4 [shape = 's32[1]{0}', space=sflag, size = 0x4, scoped, tag = 'scoped memory for tpu_custom_call.1']
    #allocation5 [shape = 's32[1]{0}', space=sflag, size = 0x4, scoped, tag = 'scoped memory for tpu_custom_call.1']
    #allocation6 [shape = 'u8[65536]{0}', space=vmem, size = 0x10000, scoped, tag = 'input window, operand 1, single buffered']
    #allocation7 [shape = 's32[1]{0}', space=sflag, size = 0x4, scoped, tag = 'scoped memory for tpu_custom_call.1']
    #allocation8 [shape = 'u8[65536]{0}', space=vmem, size = 0x10000, scoped, tag = 'input window, operand 2, single buffered']
    #allocation9 [shape = 'u8[4096]{0}', space=vmem, size = 0x1000, scoped, tag = 'output window, operand 0, single buffered']
    #allocation10 [shape = 'u8[4096]{0}', space=vmem, size = 0x1000, scoped, tag = 'output window, operand 1, single buffered']
    #allocation11 [shape = 's32[1]{0}', space=sflag, size = 0x4, scoped, tag = 'scoped memory for tpu_custom_call.1']
    %10 = vsyncpa [#allocation4], 0
    %11 = vsyncpa [#allocation7], 0
    %12 = vsyncpa [#allocation5], 0
    %13 = vsyncpa [#allocation11], 0
    // Predicated region
    $region2: #{tpu_custom_call.1} parent=1 // pred_check
      _
    $region3: #{tpu_custom_call.1} parent=1 // pred_check_branch
      %15 = sbr.rel (0) target = $region5
    $region4: #{tpu_custom_call.1} parent=1 // pred_region
      %s17 = ssub.s32 1024, 1024
      %18 = vsyncadd [#allocation4], %s17
      %s19 = sshll.u32 [#allocation3], 4
      %s20 = int_to_ptr.vmem [resolvable:$true] %s19
      %25 = dma.hbm_to_vmem [thread:$0]  %s0, 1024, %s20, [#allocation4], 128, 128, 8
    $region5: #{tpu_custom_call.1} parent=1 // pred_fallthru
      _
    // Predicated region
    $region6: #{tpu_custom_call.1} parent=1 // pred_check
      _
    $region7: #{tpu_custom_call.1} parent=1 // pred_check_branch
      %27 = sbr.rel (0) target = $region9
    $region8: #{tpu_custom_call.1} parent=1 // pred_region
      %s29 = ssub.s32 2048, 2048
      %30 = vsyncadd [#allocation7], %s29
      %s31 = sshll.u32 [#allocation6], 4
      %s32 = int_to_ptr.vmem [resolvable:$true] %s31
      %37 = dma.hbm_to_vmem [thread:$0]  %s1, 2048, %s32, [#allocation7], 128, 128, 8
    $region9: #{tpu_custom_call.1} parent=1 // pred_fallthru
      _
    // Predicated region
    $region10: #{tpu_custom_call.1} parent=1 // pred_check
      _
    $region11: #{tpu_custom_call.1} parent=1 // pred_check_branch
      %39 = sbr.rel (0) target = $region13
    $region12: #{tpu_custom_call.1} parent=1 // pred_region
      %s41 = ssub.s32 2048, 2048
      %42 = vsyncadd [#allocation7], %s41
      %s43 = sshll.u32 [#allocation8], 4
      %s44 = int_to_ptr.vmem [resolvable:$true] %s43
      %49 = dma.hbm_to_vmem [thread:$0]  %s2, 2048, %s44, [#allocation7], 128, 128, 8
    $region13: #{tpu_custom_call.1} parent=1 // pred_fallthru
      _
    // Predicated region
    $region14: #{tpu_custom_call.1} parent=1 // pred_check
      _
    $region15: #{tpu_custom_call.1} parent=1 // pred_check_branch
      %51 = sbr.rel (0) target = $region17
    $region16: #{tpu_custom_call.1} parent=1 // pred_region
      %52 = dma.done [#allocation4], 1024
    $region17: #{tpu_custom_call.1} parent=1 // pred_fallthru
      _
    // Predicated region
    $region18: #{tpu_custom_call.1} parent=1 // pred_check
      _
    $region19: #{tpu_custom_call.1} parent=1 // pred_check_branch
      %54 = sbr.rel (0) target = $region21
    $region20: #{tpu_custom_call.1} parent=1 // pred_region
      %55 = dma.done [#allocation7], 2048
    $region21: #{tpu_custom_call.1} parent=1 // pred_fallthru
      _
    // Predicated region
    $region22: #{tpu_custom_call.1} parent=1 // pred_check
      _
    $region23: #{tpu_custom_call.1} parent=1 // pred_check_branch
      %57 = sbr.rel (0) target = $region25
    $region24: #{tpu_custom_call.1} parent=1 // pred_region
      %58 = dma.done [#allocation7], 2048
    $region25: #{tpu_custom_call.1} parent=1 // pred_fallthru
      _
    %p59 = scmp.eq.s32.totalorder 0, 0
    // Predicated region
    $region26: #{tpu_custom_call.1} parent=1 // pred_check
      %p60 = pneg %p59
    $region27: #{tpu_custom_call.1} parent=1 // pred_check_branch
      %62 = sbr.rel (%p60) target = $region29
    $region28: #{tpu_custom_call.1} parent=1 // pred_region
      %63 = vst [vmem:[#allocation2] sm:$0xff] 0.0
    $region29: #{tpu_custom_call.1} parent=1 // pred_fallthru
      _
    %v64 = vld [vmem:[#allocation2] sm:$0xff]
    %v65 = vld [vmem:[#allocation3] sm:$0xff]
    %v66 = vld [vmem:[#allocation3 + $0x8] sm:$0xff]
    %v67 = vld [vmem:[#allocation3 + $0x10] sm:$0xff]
    %v68 = vld [vmem:[#allocation3 + $0x18] sm:$0xff]
    %v69 = vld [vmem:[#allocation3 + $0x20] sm:$0xff]
    %v70 = vld [vmem:[#allocation3 + $0x28] sm:$0xff]
    %v71 = vld [vmem:[#allocation3 + $0x30] sm:$0xff]
    %v72 = vld [vmem:[#allocation3 + $0x38] sm:$0xff]
    %v73 = vadd.f32 %v65, %v66
    %v74 = vadd.f32 %v73, %v67
    %v75 = vadd.f32 %v74, %v68
    %v76 = vadd.f32 %v75, %v69
    %v77 = vadd.f32 %v76, %v70
    %v78 = vadd.f32 %v77, %v71
    %v79 = vadd.f32 %v78, %v72
    %v80 = vadd.f32 %v64, %v79
    %81 = vst [vmem:[#allocation2] sm:$0xff] %v80
    // Predicated region
    $region30: #{tpu_custom_call.1} parent=1 // pred_check
      %p82 = pneg %p59
    $region31: #{tpu_custom_call.1} parent=1 // pred_check_branch
      %84 = sbr.rel (%p82) target = $region33
    $region32: #{tpu_custom_call.1} parent=1 // pred_region
      %v85 = vld [vmem:[#allocation2] sm:$0xff]
      %v86 = vld [vmem:[#allocation6] sm:$0xff]
      %v87 = vld [vmem:[#allocation6 + $0x8] sm:$0xff]
      %v88 = vld [vmem:[#allocation6 + $0x10] sm:$0xff]
      %v89 = vld [vmem:[#allocation6 + $0x18] sm:$0xff]
      %v90 = vld [vmem:[#allocation6 + $0x20] sm:$0xff]
      %v91 = vld [vmem:[#allocation6 + $0x28] sm:$0xff]
      %v92 = vld [vmem:[#allocation6 + $0x30] sm:$0xff]
      %v93 = vld [vmem:[#allocation6 + $0x38] sm:$0xff]
      %v94 = vld [vmem:[#allocation6 + $0x40] sm:$0xff]
      %v95 = vld [vmem:[#allocation6 + $0x48] sm:$0xff]
      %v96 = vld [vmem:[#allocation6 + $0x50] sm:$0xff]
      %v97 = vld [vmem:[#allocation6 + $0x58] sm:$0xff]
      %v98 = vld [vmem:[#allocation6 + $0x60] sm:$0xff]
      %v99 = vld [vmem:[#allocation6 + $0x68] sm:$0xff]
      %v100 = vld [vmem:[#allocation6 + $0x70] sm:$0xff]
      %v101 = vld [vmem:[#allocation6 + $0x78] sm:$0xff]
      %v102 = vld [vmem:[#allocation8] sm:$0xff]
      %v103 = vld [vmem:[#allocation8 + $0x8] sm:$0xff]
      %v104 = vld [vmem:[#allocation8 + $0x10] sm:$0xff]
      %v105 = vld [vmem:[#allocation8 + $0x18] sm:$0xff]
      %v106 = vld [vmem:[#allocation8 + $0x20] sm:$0xff]
      %v107 = vld [vmem:[#allocation8 + $0x28] sm:$0xff]
      %v108 = vld [vmem:[#allocation8 + $0x30] sm:$0xff]
      %v109 = vld [vmem:[#allocation8 + $0x38] sm:$0xff]
      %v110 = vld [vmem:[#allocation8 + $0x40] sm:$0xff]
      %v111 = vld [vmem:[#allocation8 + $0x48] sm:$0xff]
      %v112 = vld [vmem:[#allocation8 + $0x50] sm:$0xff]
      %v113 = vld [vmem:[#allocation8 + $0x58] sm:$0xff]
      %v114 = vld [vmem:[#allocation8 + $0x60] sm:$0xff]
      %v115 = vld [vmem:[#allocation8 + $0x68] sm:$0xff]
      %v116 = vld [vmem:[#allocation8 + $0x70] sm:$0xff]
      %v117 = vld [vmem:[#allocation8 + $0x78] sm:$0xff]
      %v118 = vlaneseq
      %v119 = vand.u32 %v118, 127
      %vm120 = vcmp.lt.s32.totalorder %v119, 8
      %121 = vmatprep.subr.mxu0 0.0
      %122 = vmatpush1.msra.mxu0 %v86
      %123 = vmatprep.subr.mxu0 0.0
      %124 = vmatpush1.msra.mxu0 %v87
      %125 = vmatprep.subr.mxu0 0.0
      %126 = vmatpush1.msra.mxu0 %v88
      %127 = vmatprep.subr.mxu0 0.0
      %128 = vmatpush1.msra.mxu0 %v89
      %129 = vmatprep.subr.mxu0 0.0
      %130 = vmatpush1.msra.mxu0 %v90
      %131 = vmatprep.subr.mxu0 0.0
      %132 = vmatpush1.msra.mxu0 %v91
      %133 = vmatprep.subr.mxu0 0.0
      %134 = vmatpush1.msra.mxu0 %v92
      %135 = vmatprep.subr.mxu0 0.0
      %136 = vmatpush1.msra.mxu0 %v93
      %137 = vmatprep.subr.mxu0 0.0
      %138 = vmatpush1.msra.mxu0 %v94
      %139 = vmatprep.subr.mxu0 0.0
      %140 = vmatpush1.msra.mxu0 %v95
      %141 = vmatprep.subr.mxu0 0.0
      %142 = vmatpush1.msra.mxu0 %v96
      %143 = vmatprep.subr.mxu0 0.0
      %144 = vmatpush1.msra.mxu0 %v97
      %145 = vmatprep.subr.mxu0 0.0
      %146 = vmatpush1.msra.mxu0 %v98
      %147 = vmatprep.subr.mxu0 0.0
      %148 = vmatpush1.msra.mxu0 %v99
      %149 = vmatprep.subr.mxu0 0.0
      %150 = vmatpush1.msra.mxu0 %v100
      %151 = vmatprep.subr.mxu0 0.0
      %152 = vmatpush1.msra.mxu0 %v101
      %153 = vmatprep.subr.mxu0 0.0
      %154 = vmatpush1.msra.mxu0 0.0
      %155 = vmatprep.subr.mxu0 0.0
      %156 = vmatpush1.msra.mxu0 0.0
      %157 = vmatprep.subr.mxu0 0.0
      %158 = vmatpush1.msra.mxu0 0.0
      %159 = vmatprep.subr.mxu0 0.0
      %160 = vmatpush1.msra.mxu0 0.0
      %161 = vmatprep.subr.mxu0 0.0
      %162 = vmatpush1.msra.mxu0 0.0
      %163 = vmatprep.subr.mxu0 0.0
      %164 = vmatpush1.msra.mxu0 0.0
      %165 = vmatprep.subr.mxu0 0.0
      %166 = vmatpush1.msra.mxu0 0.0
      %167 = vmatprep.subr.mxu0 0.0
      %168 = vmatpush1.msra.mxu0 0.0
      %169 = vmatprep.subr.mxu0 0.0
      %170 = vmatpush1.msra.mxu0 0.0
      %171 = vmatprep.subr.mxu0 0.0
      %172 = vmatpush1.msra.mxu0 0.0
      %173 = vmatprep.subr.mxu0 0.0
      %174 = vmatpush1.msra.mxu0 0.0
      %175 = vmatprep.subr.mxu0 0.0
      %176 = vmatpush1.msra.mxu0 0.0
      %177 = vmatprep.subr.mxu0 0.0
      %178 = vmatpush1.msra.mxu0 0.0
      %179 = vmatprep.subr.mxu0 0.0
      %180 = vmatpush1.msra.mxu0 0.0
      %181 = vmatprep.subr.mxu0 0.0
      %182 = vmatpush1.msra.mxu0 0.0
      %183 = vmatprep.subr.mxu0 0.0
      %184 = vmatpush1.msra.mxu0 0.0
      %185 = vmatprep.mubr.f32.mxu0 0.0
      %186 = vmatmul.mubr.f32.gmra.mrb[0].mxu0 %v85
      %v187 = vpop.f32.mrb[0].mxu0
      %v188 = vadd.f32 0.0, %v187
      %v189 = vpop.f32.mrb[0].mxu0
      %190 = vdwg.mxu0
      %v191 = vsel %vm120, %v188, -1e+30
      %192 = vmax.xlane.f32.xlu0 %v191
      %v193 = vpop.xlane.xlu0 %192
      %v194 = vsub.f32 %v191, %v193
      %v195 = vmul.f32 %v194, 1.442695
      %v196 = vpow.pop %v195
      %197 = vadd.xlane.f32.xlu0 %v196
      %v198 = vpop.xlane.xlu0 %197
      %v199 = vrcp.pop %v198
      %v200 = vmul.f32 %v196, %v199
      %201 = vmatprep.subr.mxu0 0.0
      %202 = vmatpush1.msra.mxu0 %v102
      %203 = vmatprep.subr.mxu0 0.0
      %204 = vmatpush1.msra.mxu0 %v103
      %205 = vmatprep.subr.mxu0 0.0
      %206 = vmatpush1.msra.mxu0 %v104
      %207 = vmatprep.subr.mxu0 0.0
      %208 = vmatpush1.msra.mxu0 %v105
      %209 = vmatprep.subr.mxu0 0.0
      %210 = vmatpush1.msra.mxu0 %v106
      %211 = vmatprep.subr.mxu0 0.0
      %212 = vmatpush1.msra.mxu0 %v107
      %213 = vmatprep.subr.mxu0 0.0
      %214 = vmatpush1.msra.mxu0 %v108
      %215 = vmatprep.subr.mxu0 0.0
      %216 = vmatpush1.msra.mxu0 %v109
      %217 = vmatprep.subr.mxu0 0.0
      %218 = vmatpush1.msra.mxu0 %v110
      %219 = vmatprep.subr.mxu0 0.0
      %220 = vmatpush1.msra.mxu0 %v111
      %221 = vmatprep.subr.mxu0 0.0
      %222 = vmatpush1.msra.mxu0 %v112
      %223 = vmatprep.subr.mxu0 0.0
      %224 = vmatpush1.msra.mxu0 %v113
      %225 = vmatprep.subr.mxu0 0.0
      %226 = vmatpush1.msra.mxu0 %v114
      %227 = vmatprep.subr.mxu0 0.0
      %228 = vmatpush1.msra.mxu0 %v115
      %229 = vmatprep.subr.mxu0 0.0
      %230 = vmatpush1.msra.mxu0 %v116
      %231 = vmatprep.subr.mxu0 0.0
      %232 = vmatpush1.msra.mxu0 %v117
      %233 = vmatprep.subr.mxu0 0.0
      %234 = vmatpush1.msra.mxu0 0.0
      %235 = vmatprep.subr.mxu0 0.0
      %236 = vmatpush1.msra.mxu0 0.0
      %237 = vmatprep.subr.mxu0 0.0
      %238 = vmatpush1.msra.mxu0 0.0
      %239 = vmatprep.subr.mxu0 0.0
      %240 = vmatpush1.msra.mxu0 0.0
      %241 = vmatprep.subr.mxu0 0.0
      %242 = vmatpush1.msra.mxu0 0.0
      %243 = vmatprep.subr.mxu0 0.0
      %244 = vmatpush1.msra.mxu0 0.0
      %245 = vmatprep.subr.mxu0 0.0
      %246 = vmatpush1.msra.mxu0 0.0
      %247 = vmatprep.subr.mxu0 0.0
      %248 = vmatpush1.msra.mxu0 0.0
      %249 = vmatprep.subr.mxu0 0.0
      %250 = vmatpush1.msra.mxu0 0.0
      %251 = vmatprep.subr.mxu0 0.0
      %252 = vmatpush1.msra.mxu0 0.0
      %253 = vmatprep.subr.mxu0 0.0
      %254 = vmatpush1.msra.mxu0 0.0
      %255 = vmatprep.subr.mxu0 0.0
      %256 = vmatpush1.msra.mxu0 0.0
      %257 = vmatprep.subr.mxu0 0.0
      %258 = vmatpush1.msra.mxu0 0.0
      %259 = vmatprep.subr.mxu0 0.0
      %260 = vmatpush1.msra.mxu0 0.0
      %261 = vmatprep.subr.mxu0 0.0
      %262 = vmatpush1.msra.mxu0 0.0
      %263 = vmatprep.subr.mxu0 0.0
      %264 = vmatpush1.msra.mxu0 0.0
      %265 = vmatprep.mubr.f32.mxu0 0.0
      %266 = vmatmul.mubr.f32.gmra.mrb[0].mxu0 %v200
      %v267 = vpop.f32.mrb[0].mxu0
      %v268 = vadd.f32 0.0, %v267
      %v269 = vpop.f32.mrb[0].mxu0
      %270 = vdwg.mxu0
      %v271 = vadd.f32 %v85, %v268
      %272 = vmatprep.subr.mxu0 0.0
      %273 = vmatpush1.msra.mxu0 %v86
      %274 = vmatprep.subr.mxu0 0.0
      %275 = vmatpush1.msra.mxu0 %v87
      %276 = vmatprep.subr.mxu0 0.0
      %277 = vmatpush1.msra.mxu0 %v88
      %278 = vmatprep.subr.mxu0 0.0
      %279 = vmatpush1.msra.mxu0 %v89
      %280 = vmatprep.subr.mxu0 0.0
      %281 = vmatpush1.msra.mxu0 %v90
      %282 = vmatprep.subr.mxu0 0.0
      %283 = vmatpush1.msra.mxu0 %v91
      %284 = vmatprep.subr.mxu0 0.0
      %285 = vmatpush1.msra.mxu0 %v92
      %286 = vmatprep.subr.mxu0 0.0
      %287 = vmatpush1.msra.mxu0 %v93
      %288 = vmatprep.subr.mxu0 0.0
      %289 = vmatpush1.msra.mxu0 %v94
      %290 = vmatprep.subr.mxu0 0.0
      %291 = vmatpush1.msra.mxu0 %v95
      %292 = vmatprep.subr.mxu0 0.0
      %293 = vmatpush1.msra.mxu0 %v96
      %294 = vmatprep.subr.mxu0 0.0
      %295 = vmatpush1.msra.mxu0 %v97
      %296 = vmatprep.subr.mxu0 0.0
      %297 = vmatpush1.msra.mxu0 %v98
      %298 = vmatprep.subr.mxu0 0.0
      %299 = vmatpush1.msra.mxu0 %v99
      %300 = vmatprep.subr.mxu0 0.0
      %301 = vmatpush1.msra.mxu0 %v100
      %302 = vmatprep.subr.mxu0 0.0
      %303 = vmatpush1.msra.mxu0 %v101
      %304 = vmatprep.subr.mxu0 0.0
      %305 = vmatpush1.msra.mxu0 0.0
      %306 = vmatprep.subr.mxu0 0.0
      %307 = vmatpush1.msra.mxu0 0.0
      %308 = vmatprep.subr.mxu0 0.0
      %309 = vmatpush1.msra.mxu0 0.0
      %310 = vmatprep.subr.mxu0 0.0
      %311 = vmatpush1.msra.mxu0 0.0
      %312 = vmatprep.subr.mxu0 0.0
      %313 = vmatpush1.msra.mxu0 0.0
      %314 = vmatprep.subr.mxu0 0.0
      %315 = vmatpush1.msra.mxu0 0.0
      %316 = vmatprep.subr.mxu0 0.0
      %317 = vmatpush1.msra.mxu0 0.0
      %318 = vmatprep.subr.mxu0 0.0
      %319 = vmatpush1.msra.mxu0 0.0
      %320 = vmatprep.subr.mxu0 0.0
      %321 = vmatpush1.msra.mxu0 0.0
      %322 = vmatprep.subr.mxu0 0.0
      %323 = vmatpush1.msra.mxu0 0.0
      %324 = vmatprep.subr.mxu0 0.0
      %325 = vmatpush1.msra.mxu0 0.0
      %326 = vmatprep.subr.mxu0 0.0
      %327 = vmatpush1.msra.mxu0 0.0
      %328 = vmatprep.subr.mxu0 0.0
      %329 = vmatpush1.msra.mxu0 0.0
      %330 = vmatprep.subr.mxu0 0.0
      %331 = vmatpush1.msra.mxu0 0.0
      %332 = vmatprep.subr.mxu0 0.0
      %333 = vmatpush1.msra.mxu0 0.0
      %334 = vmatprep.subr.mxu0 0.0
      %335 = vmatpush1.msra.mxu0 0.0
      %336 = vmatprep.mubr.f32.mxu0 0.0
      %337 = vmatmul.mubr.f32.gmra.mrb[0].mxu0 %v271
      %v338 = vpop.f32.mrb[0].mxu0
      %v339 = vadd.f32 0.0, %v338
      %v340 = vpop.f32.mrb[0].mxu0
      %341 = vdwg.mxu0
      %v342 = vsel %vm120, %v339, -1e+30
      %343 = vmax.xlane.f32.xlu0 %v342
      %v344 = vpop.xlane.xlu0 %343
      %v345 = vsub.f32 %v342, %v344
      %v346 = vmul.f32 %v345, 1.442695
      %v347 = vpow.pop %v346
      %348 = vadd.xlane.f32.xlu0 %v347
      %v349 = vpop.xlane.xlu0 %348
      %v350 = vrcp.pop %v349
      %v351 = vmul.f32 %v347, %v350
      %352 = vmatprep.subr.mxu0 0.0
      %353 = vmatpush1.msra.mxu0 %v102
      %354 = vmatprep.subr.mxu0 0.0
      %355 = vmatpush1.msra.mxu0 %v103
      %356 = vmatprep.subr.mxu0 0.0
      %357 = vmatpush1.msra.mxu0 %v104
      %358 = vmatprep.subr.mxu0 0.0
      %359 = vmatpush1.msra.mxu0 %v105
      %360 = vmatprep.subr.mxu0 0.0
      %361 = vmatpush1.msra.mxu0 %v106
      %362 = vmatprep.subr.mxu0 0.0
      %363 = vmatpush1.msra.mxu0 %v107
      %364 = vmatprep.subr.mxu0 0.0
      %365 = vmatpush1.msra.mxu0 %v108
      %366 = vmatprep.subr.mxu0 0.0
      %367 = vmatpush1.msra.mxu0 %v109
      %368 = vmatprep.subr.mxu0 0.0
      %369 = vmatpush1.msra.mxu0 %v110
      %370 = vmatprep.subr.mxu0 0.0
      %371 = vmatpush1.msra.mxu0 %v111
      %372 = vmatprep.subr.mxu0 0.0
      %373 = vmatpush1.msra.mxu0 %v112
      %374 = vmatprep.subr.mxu0 0.0
      %375 = vmatpush1.msra.mxu0 %v113
      %376 = vmatprep.subr.mxu0 0.0
      %377 = vmatpush1.msra.mxu0 %v114
      %378 = vmatprep.subr.mxu0 0.0
      %379 = vmatpush1.msra.mxu0 %v115
      %380 = vmatprep.subr.mxu0 0.0
      %381 = vmatpush1.msra.mxu0 %v116
      %382 = vmatprep.subr.mxu0 0.0
      %383 = vmatpush1.msra.mxu0 %v117
      %384 = vmatprep.subr.mxu0 0.0
      %385 = vmatpush1.msra.mxu0 0.0
      %386 = vmatprep.subr.mxu0 0.0
      %387 = vmatpush1.msra.mxu0 0.0
      %388 = vmatprep.subr.mxu0 0.0
      %389 = vmatpush1.msra.mxu0 0.0
      %390 = vmatprep.subr.mxu0 0.0
      %391 = vmatpush1.msra.mxu0 0.0
      %392 = vmatprep.subr.mxu0 0.0
      %393 = vmatpush1.msra.mxu0 0.0
      %394 = vmatprep.subr.mxu0 0.0
      %395 = vmatpush1.msra.mxu0 0.0
      %396 = vmatprep.subr.mxu0 0.0
      %397 = vmatpush1.msra.mxu0 0.0
      %398 = vmatprep.subr.mxu0 0.0
      %399 = vmatpush1.msra.mxu0 0.0
      %400 = vmatprep.subr.mxu0 0.0
      %401 = vmatpush1.msra.mxu0 0.0
      %402 = vmatprep.subr.mxu0 0.0
      %403 = vmatpush1.msra.mxu0 0.0
      %404 = vmatprep.subr.mxu0 0.0
      %405 = vmatpush1.msra.mxu0 0.0
      %406 = vmatprep.subr.mxu0 0.0
      %407 = vmatpush1.msra.mxu0 0.0
      %408 = vmatprep.subr.mxu0 0.0
      %409 = vmatpush1.msra.mxu0 0.0
      %410 = vmatprep.subr.mxu0 0.0
      %411 = vmatpush1.msra.mxu0 0.0
      %412 = vmatprep.subr.mxu0 0.0
      %413 = vmatpush1.msra.mxu0 0.0
      %414 = vmatprep.subr.mxu0 0.0
      %415 = vmatpush1.msra.mxu0 0.0
      %416 = vmatprep.mubr.f32.mxu0 0.0
      %417 = vmatmul.mubr.f32.gmra.mrb[0].mxu0 %v351
      %v418 = vpop.f32.mrb[0].mxu0
      %v419 = vadd.f32 0.0, %v418
      %v420 = vpop.f32.mrb[0].mxu0
      %421 = vdwg.mxu0
      %v422 = vadd.f32 %v271, %v419
      %423 = vst [vmem:[#allocation9] sm:$0xff] %v422
      %424 = vst [vmem:[#allocation10] sm:$0xff] %v351
    $region33: #{tpu_custom_call.1} parent=1 // pred_fallthru
      _
    // Predicated region
    $region34: #{tpu_custom_call.1} parent=1 // pred_check
      _
    $region35: #{tpu_custom_call.1} parent=1 // pred_check_branch
      %426 = sbr.rel (0) target = $region37
    $region36: #{tpu_custom_call.1} parent=1 // pred_region
      %s428 = ssub.s32 128, 128
      %429 = vsyncadd [#allocation5], %s428
      %s431 = sshll.u32 [#allocation9], 4
      %s432 = int_to_ptr.vmem [resolvable:$true] %s431
      %434 = dma.vmem_to_hbm [thread:$0]  %s432, 128, %s3, [#allocation5]
    $region37: #{tpu_custom_call.1} parent=1 // pred_fallthru
      _
    // Predicated region
    $region38: #{tpu_custom_call.1} parent=1 // pred_check
      _
    $region39: #{tpu_custom_call.1} parent=1 // pred_check_branch
      %436 = sbr.rel (0) target = $region41
    $region40: #{tpu_custom_call.1} parent=1 // pred_region
      %s438 = ssub.s32 128, 128
      %439 = vsyncadd [#allocation11], %s438
      %s441 = sshll.u32 [#allocation10], 4
      %s442 = int_to_ptr.vmem [resolvable:$true] %s441
      %444 = dma.vmem_to_hbm [thread:$0]  %s442, 128, %s4, [#allocation11]
    $region41: #{tpu_custom_call.1} parent=1 // pred_fallthru
      _
    // Predicated region
    $region42: #{tpu_custom_call.1} parent=1 // pred_check
      _
    $region43: #{tpu_custom_call.1} parent=1 // pred_check_branch
      %446 = sbr.rel (0) target = $region45
    $region44: #{tpu_custom_call.1} parent=1 // pred_region
      %447 = dma.done [#allocation5], 128
    $region45: #{tpu_custom_call.1} parent=1 // pred_fallthru
      _
    // Predicated region
    $region46: #{tpu_custom_call.1} parent=1 // pred_check
      _
    $region47: #{tpu_custom_call.1} parent=1 // pred_check_branch
      %449 = sbr.rel (0) target = $region49
    $region48: #{tpu_custom_call.1} parent=1 // pred_region
      %450 = dma.done [#allocation11], 128
    $region49: #{tpu_custom_call.1} parent=1 // pred_fallthru
      _
    %451 = vsyncpa [#allocation4], 1
    %452 = vsyncpa [#allocation7], 1
    %453 = vsyncpa [#allocation5], 1
    %454 = vsyncpa [#allocation11], 1

</llo_original>
